<compile_context>
chip_gen: v5e
topology: v5e:2x2
jax: 0.10.0
libtpu: 0.0.40
codegen_flags: <defaults>
</compile_context>

<pallas_src>
import functools
import math

import jax
import jax.numpy as jnp
from jax.experimental import pallas as pl
from jax.experimental.pallas import tpu as pltpu


# ---------------------------------------------------------------------------
# Small helpers
# ---------------------------------------------------------------------------

def _pick_tile(n, cap, quantum=8):
    """Largest divisor of n that is <= cap and a multiple of `quantum`;
    falls back to n itself (a full-extent block is always legal)."""
    if n <= cap:
        return n
    for d in range(cap, quantum - 1, -1):
        if n % d == 0 and d % quantum == 0:
            return d
    return n


def _vmem_limit(need_bytes):
    """Scoped-VMEM request: 2x the estimated footprint, floored at 32 MiB."""
    return int(min(max(2 * int(need_bytes), 32 << 20), 100 << 20))


# ---------------------------------------------------------------------------
# Kernel A: LayerNorm1 + QKV projection + rotary (rotate-half & scale folded)
# ---------------------------------------------------------------------------

def _ln_qkv_rope_kernel(x_ref, g_ref, w_ref, cos_ref, sin_ref,
                        q_ref, k_ref, v_ref):
    # x:   (tt, C)  f32   rows of one batch element (pre-LN residual stream)
    # g:   (1, C)   f32   LayerNorm1 weight
    # w:   (C, 5C)  bf16  [Wq*s | Wk | (Wq@R)*s | Wk@R | Wv],  s = Dh**-0.5
    # cos/sin: (tt, C) f32 per-head rope tables (shared by q and k halves)
    # q/k/v: (tt, C) bf16 outputs
    x = x_ref[...]
    mu = jnp.mean(x, axis=-1, keepdims=True)
    d = x - mu
    var = jnp.mean(d * d, axis=-1, keepdims=True)
    xn = (d * jax.lax.rsqrt(var + 1e-5) * g_ref[...]).astype(jnp.bfloat16)

    h = jnp.dot(xn, w_ref[...], preferred_element_type=jnp.float32)  # (tt, 5C)
    c = x.shape[-1]
    cos = cos_ref[...]
    sin = sin_ref[...]
    q_ref[...] = (cos * h[:, 0:c] + sin * h[:, 2 * c:3 * c]).astype(q_ref.dtype)
    k_ref[...] = (cos * h[:, c:2 * c] + sin * h[:, 3 * c:4 * c]).astype(k_ref.dtype)
    v_ref[...] = h[:, 4 * c:5 * c].astype(v_ref.dtype)


def ln_qkv_rope(xb, g, w_big, cos, sin, *, t_tile):
    B, T, C = xb.shape
    nt = T // t_tile
    qkv_sds = jax.ShapeDtypeStruct((B, T, C), jnp.bfloat16)
    need = 2 * (t_tile * C * 4            # x block
                + 2 * t_tile * C * 4      # cos + sin blocks
                + C * 5 * C * 2           # w_big
                + 3 * t_tile * C * 2)     # q/k/v output blocks
    # TODO(synk): pipeline_mode=pl.Buffered(1) on the constant-index w_big spec
    # would halve its VMEM footprint (mostly relevant on v7x's 64 MiB).
    return pl.pallas_call(
        _ln_qkv_rope_kernel,
        out_shape=(qkv_sds, qkv_sds, qkv_sds),
        grid=(nt, B),                     # B innermost: cos/sin fetched once per t
        in_specs=[
            pl.BlockSpec((None, t_tile, C), lambda t, b: (b, t, 0)),
            pl.BlockSpec((1, C), lambda t, b: (0, 0)),
            pl.BlockSpec((C, 5 * C), lambda t, b: (0, 0)),
            pl.BlockSpec((t_tile, C), lambda t, b: (t, 0)),
            pl.BlockSpec((t_tile, C), lambda t, b: (t, 0)),
        ],
        out_specs=(
            pl.BlockSpec((None, t_tile, C), lambda t, b: (b, t, 0)),
            pl.BlockSpec((None, t_tile, C), lambda t, b: (b, t, 0)),
            pl.BlockSpec((None, t_tile, C), lambda t, b: (b, t, 0)),
        ),
        compiler_params=pltpu.CompilerParams(
            dimension_semantics=("parallel", "parallel"),
            vmem_limit_bytes=_vmem_limit(need)),
    )(xb, g, w_big, cos, sin)


# ---------------------------------------------------------------------------
# Kernel B: flash-style attention (online softmax) + out-proj + residual
# ---------------------------------------------------------------------------

def _flash_attn_kernel(num_heads, q_ref, k_ref, v_ref, res_ref, wo_ref, o_ref,
                       m_sc, l_sc, acc_sc):
    # q:   (tq, C) bf16  rotary + Dh**-0.5 already applied
    # k/v: (tk, C) bf16  rotary applied to k
    # res: (tq, C) f32   residual stream
    # wo:  (C, C)  bf16  out_proj weight (already (in, out))
    # m/l: (H, tq, 1) f32, acc: (H, tq, Dh) f32   online-softmax state
    ki = pl.program_id(2)
    C = res_ref.shape[-1]
    Dh = C // num_heads

    @pl.when(ki == 0)
    def _():
        m_sc[...] = jnp.full(m_sc.shape, -1e30, dtype=m_sc.dtype)
        l_sc[...] = jnp.zeros(l_sc.shape, dtype=l_sc.dtype)
        acc_sc[...] = jnp.zeros(acc_sc.shape, dtype=acc_sc.dtype)

    q = q_ref[...]
    k = k_ref[...]
    v = v_ref[...]
    # TODO(synk): switch to lax.fori_loop(unroll=True) over heads for tighter
    # live ranges at large H; H is small in the tested configs.
    for hh in range(num_heads):
        sl = slice(hh * Dh, (hh + 1) * Dh)
        s = jax.lax.dot_general(q[:, sl], k[:, sl],
                                (((1,), (1,)), ((), ())),
                                preferred_element_type=jnp.float32)   # (tq, tk)
        m_prev = m_sc[hh]
        m_new = jnp.maximum(m_prev, jnp.max(s, axis=-1, keepdims=True))
        alpha = jnp.exp(m_prev - m_new)
        p = jnp.exp(s - m_new)
        l_sc[hh] = alpha * l_sc[hh] + jnp.sum(p, axis=-1, keepdims=True)
        acc_sc[hh] = alpha * acc_sc[hh] + jnp.dot(
            p.astype(jnp.bfloat16), v[:, sl],
            preferred_element_type=jnp.float32)
        m_sc[hh] = m_new

    @pl.when(ki == pl.num_programs(2) - 1)
    def _():
        # Deferred softmax normalization on the (tq, Dh) accumulators, per-head
        # outputs concatenated in registers, then a single lane-dense
        # (tq,C)@(C,C) out-projection + residual add.
        outs = [(acc_sc[hh] * pl.reciprocal(l_sc[hh], approx=True)
                 ).astype(jnp.bfloat16) for hh in range(num_heads)]
        attn = jnp.concatenate(outs, axis=-1)                        # (tq, C)
        o_ref[...] = res_ref[...] + jnp.dot(attn, wo_ref[...],
                                            preferred_element_type=jnp.float32)


def attention_block(q, k, v, res, w_out, num_heads, *, q_tile, kv_tile):
    B, T, C = res.shape
    nq = T // q_tile
    nk = T // kv_tile
    Dh = C // num_heads
    kernel = functools.partial(_flash_attn_kernel, num_heads)
    scratch = (2 * num_heads * q_tile * 128 * 4
               + num_heads * q_tile * max(Dh, 128) * 4)
    need = 2 * (q_tile * C * 2 + 2 * kv_tile * C * 2
                + q_tile * C * 4 + C * C * 2 + q_tile * C * 4) + scratch
    # TODO(synk): input_output_aliases={3: 0} (residual -> output) would avoid a
    # second (B,T,C) HBM buffer; left off to keep eager-mode donation simple.
    return pl.pallas_call(
        kernel,
        out_shape=jax.ShapeDtypeStruct((B, T, C), jnp.float32),
        grid=(B, nq, nk),
        in_specs=[
            pl.BlockSpec((None, q_tile, C), lambda b, qi, ki: (b, qi, 0)),
            pl.BlockSpec((None, kv_tile, C), lambda b, qi, ki: (b, ki, 0)),
            pl.BlockSpec((None, kv_tile, C), lambda b, qi, ki: (b, ki, 0)),
            pl.BlockSpec((None, q_tile, C), lambda b, qi, ki: (b, qi, 0)),
            pl.BlockSpec((C, C), lambda b, qi, ki: (0, 0)),
        ],
        out_specs=pl.BlockSpec((None, q_tile, C), lambda b, qi, ki: (b, qi, 0)),
        scratch_shapes=[pltpu.VMEM((num_heads, q_tile, 1), jnp.float32),
                        pltpu.VMEM((num_heads, q_tile, 1), jnp.float32),
                        pltpu.VMEM((num_heads, q_tile, Dh), jnp.float32)],
        compiler_params=pltpu.CompilerParams(
            dimension_semantics=("parallel", "parallel", "arbitrary"),
            vmem_limit_bytes=_vmem_limit(need)),
    )(q, k, v, res, w_out)


# ---------------------------------------------------------------------------
# Kernel C: LayerNorm2 + causal-conv FFN (F-tiled, register tap accumulation)
# ---------------------------------------------------------------------------

def _ln_ffn_kernel(kernel_size, x_ref, g_ref, wc_ref, w2_ref, o_ref, xp_ref):
    # x:  (T, C)       f32  residual stream
    # g:  (1, C)       f32  LayerNorm2 weight
    # wc: (K, C, tf)   bf16 conv weight tile, K**-0.5 pre-folded
    # w2: (tf, C)      bf16 ffn_2 weight tile (transposed to (in, out))
    # xp: (T+K-1, C)   bf16 scratch: left-zero-padded, normalized input
    K = kernel_size
    fi = pl.program_id(1)
    x = x_ref[...]
    T, C = x.shape

    @pl.when(fi == 0)
    def _():
        # LayerNorm2 + 'LEFT' causal zero padding done once per batch element;
        # the scratch is reused by every F tile of the same b.
        mu = jnp.mean(x, axis=-1, keepdims=True)
        d = x - mu
        var = jnp.mean(d * d, axis=-1, keepdims=True)
        xn = d * jax.lax.rsqrt(var + 1e-5) * g_ref[...]
        xp_ref[pl.ds(0, K - 1), :] = jnp.zeros((K - 1, C), xp_ref.dtype)
        xp_ref[pl.ds(K - 1, T), :] = xn.astype(xp_ref.dtype)

    # Causal Conv1d == sum of K time-shifted matmuls, accumulated in registers
    # (single producer value, no per-tap VMEM read-modify-write).
    acc = jnp.dot(xp_ref[pl.ds(0, T), :], wc_ref[0],
                  preferred_element_type=jnp.float32)                # (T, tf)
    for j in range(1, K):
        acc = acc + jnp.dot(xp_ref[pl.ds(j, T), :], wc_ref[j],
                            preferred_element_type=jnp.float32)
    h = acc * jax.nn.sigmoid(acc)                                    # SiLU
    contrib = jnp.dot(h.astype(jnp.bfloat16), w2_ref[...],
                      preferred_element_type=jnp.float32)            # (T, C)

    @pl.when(fi == 0)
    def _():
        o_ref[...] = x + contrib           # residual + first F-tile contribution

    @pl.when(fi != 0)
    def _():
        o_ref[...] += contrib              # accumulate remaining F tiles


def ffn_block(x, g, w_conv, w_ffn2, kernel_size, *, f_tile):
    B, T, C = x.shape
    K, _, F_ = w_conv.shape
    nf = F_ // f_tile
    kernel = functools.partial(_ln_ffn_kernel, kernel_size)
    need = (2 * (T * C * 4 + K * C * f_tile * 2 + f_tile * C * 2 + T * C * 4)
            + (T + K - 1) * C * 2 + 2 * T * f_tile * 4)
    # TODO(synk): for very long T on v7x (64 MiB VMEM), additionally tile T with
    # a (K-1)-row halo; full-T blocks are kept here for simplicity.
    return pl.pallas_call(
        kernel,
        out_shape=jax.ShapeDtypeStruct((B, T, C), jnp.float32),
        grid=(B, nf),
        in_specs=[
            pl.BlockSpec((None, T, C), lambda b, f: (b, 0, 0)),
            pl.BlockSpec((1, C), lambda b, f: (0, 0)),
            pl.BlockSpec((K, C, f_tile), lambda b, f: (0, 0, f)),
            pl.BlockSpec((f_tile, C), lambda b, f: (f, 0)),
        ],
        out_specs=pl.BlockSpec((None, T, C), lambda b, f: (b, 0, 0)),
        scratch_shapes=[pltpu.VMEM((T + K - 1, C), jnp.bfloat16)],
        compiler_params=pltpu.CompilerParams(
            dimension_semantics=("parallel", "arbitrary"),
            vmem_limit_bytes=_vmem_limit(need)),
    )(x, g, w_conv, w_ffn2)


# ---------------------------------------------------------------------------
# GPTBlock forward (Pallas) + parameter preparation
# ---------------------------------------------------------------------------

def rope_tables(seq_len, width, base=10000.0):
    theta = base ** (-(jnp.arange(0, width, 2, dtype=jnp.float32) / width))
    pos = jnp.arange(seq_len, dtype=jnp.float32)[:, None]
    m = pos * theta[None, :]
    m = jnp.concatenate([m, m], axis=-1)
    # PyTorch stores the tables in fp16 (.half()); round-trip for fidelity.
    cos = jnp.cos(m).astype(jnp.float16).astype(jnp.float32)
    sin = jnp.sin(m).astype(jnp.float16).astype(jnp.float32)
    return cos, sin


def rotate_half_matrix(width):
    # R such that x @ R == cat([-x[..., w/2:], x[..., :w/2]], -1)
    h = width // 2
    R = jnp.zeros((width, width), jnp.float32)
    idx = jnp.arange(h)
    R = R.at[idx + h, idx].set(-1.0)
    R = R.at[idx, idx + h].set(1.0)
    return R


def prepare_pallas_params(params):
    """Fold rotate-half and the Dh**-0.5 attention scale into the QKV
    projection, fold K**-0.5 into the conv weight, tile the rope tables across
    heads once at (T, C), and cast weights to bf16."""
    C = params["w_qkv"].shape[0]
    H = params["num_heads"]
    K = params["kernel_size"]
    Dh = C // H
    scale = Dh ** -0.5
    R = jnp.kron(jnp.eye(H, dtype=jnp.float32), params["rot_mat"])   # (C, C)
    Wq = params["w_qkv"][:, 0:C]
    Wk = params["w_qkv"][:, C:2 * C]
    Wv = params["w_qkv"][:, 2 * C:3 * C]
    w_big = jnp.concatenate(
        [Wq * scale, Wk, (Wq @ R) * scale, Wk @ R, Wv],
        axis=1).astype(jnp.bfloat16)                                 # (C, 5C)
    cos1 = jnp.tile(params["rope_cos"], (1, H))                      # (T, C)
    sin1 = jnp.tile(params["rope_sin"], (1, H))
    return {
        "num_heads": H,
        "kernel_size": K,
        "ln1_g": params["ln1_g"],
        "ln2_g": params["ln2_g"],
        "w_big": w_big,
        "rope_cos1": cos1,
        "rope_sin1": sin1,
        "w_out": params["w_out"].astype(jnp.bfloat16),
        "w_conv": (params["w_conv"] * K ** -0.5).astype(jnp.bfloat16),
        "w_ffn2": params["w_ffn2"].astype(jnp.bfloat16),
    }


def gpt_block_forward(x, p, *, t_tile=None, q_tile=None, kv_tile=None,
                      f_tile=None):
    # x: (T, B, C) time-major, as in the PyTorch module.
    T, B, C = x.shape
    xb = jnp.transpose(x, (1, 0, 2))  # (B, T, C): single layout change at entry
    tt = t_tile if t_tile else _pick_tile(T, 512)        # sweep up on v5e/v6e
    tq = q_tile if q_tile else _pick_tile(T, 256)
    tk = kv_tile if kv_tile else _pick_tile(T, 256)
    F_ = p["w_ffn2"].shape[0]
    tf = f_tile if f_tile else _pick_tile(F_, 256, quantum=128)

    q, k, v = ln_qkv_rope(xb, p["ln1_g"], p["w_big"], p["rope_cos1"],
                          p["rope_sin1"], t_tile=tt)
    x1 = attention_block(q, k, v, xb, p["w_out"], p["num_heads"],
                         q_tile=tq, kv_tile=tk)
    x2 = ffn_block(x1, p["ln2_g"], p["w_conv"], p["w_ffn2"],
                   p["kernel_size"], f_tile=tf)
    return jnp.transpose(x2, (1, 0, 2)), None  # flash path: attn_logits None


# ---------------------------------------------------------------------------
# Pure-JAX f32 reference (same math, no Pallas) for verification
# ---------------------------------------------------------------------------

def gpt_block_ref(x, params):
    T, B, C = x.shape
    H = params["num_heads"]
    Dh = C // H
    K = params["kernel_size"]
    cos, sin, R = params["rope_cos"], params["rope_sin"], params["rot_mat"]

    def ln(v, g):
        mu = jnp.mean(v, -1, keepdims=True)
        d = v - mu
        var = jnp.mean(d * d, -1, keepdims=True)
        return d * jax.lax.rsqrt(var + 1e-5) * g.reshape(-1)

    residual = x
    xn = ln(x, params["ln1_g"])
    qkv = xn @ params["w_qkv"]
    q, k, v = jnp.split(qkv, 3, axis=-1)

    def to_heads(t):
        return t.reshape(T, B, H, Dh).transpose(1, 2, 0, 3).reshape(B * H, T, Dh)

    q, k, v = to_heads(q), to_heads(k), to_heads(v)
    rope = lambda t: cos[None] * t + sin[None] * (t @ R)
    q, k = rope(q), rope(k)
    s = jnp.einsum("btd,bsd->bts", q, k) / math.sqrt(Dh)
    p = jax.nn.softmax(s, axis=-1)
    a = jnp.einsum("bts,bsd->btd", p, v)
    a = a.reshape(B, H, T, Dh).transpose(2, 0, 1, 3).reshape(T, B, C)
    a = a @ params["w_out"]
    x1 = residual + a

    residual = x1
    xn = ln(x1, params["ln2_g"])
    xp = jnp.pad(xn.transpose(1, 0, 2), ((0, 0), (K - 1, 0), (0, 0)))
    shifts = jnp.stack([xp[:, j:j + T, :] for j in range(K)], axis=0)
    h = jnp.einsum("kbtc,kcf->btf", shifts, params["w_conv"]) * (K ** -0.5)
    h = h * jax.nn.sigmoid(h)
    y = h @ params["w_ffn2"]
    x2 = residual + y.transpose(1, 0, 2)
    return x2, None


# ---------------------------------------------------------------------------
# Deterministic parameter init + main
# ---------------------------------------------------------------------------

def init_params(key, C, H, K, F_):
    k0, k1, k2, k3 = jax.random.split(key, 4)
    s = 0.05
    return {
        "num_heads": H,
        "kernel_size": K,
        "ln1_g": jnp.ones((1, C), jnp.float32),     # LayerNorm weight (ones)
        "ln2_g": jnp.ones((1, C), jnp.float32),
        "w_qkv": jax.random.normal(k0, (C, 3 * C), jnp.float32) * s,   # c_attn
        "w_out": jax.random.normal(k1, (C, C), jnp.float32) * s,       # out_proj
        "w_conv": jax.random.normal(k2, (K, C, F_), jnp.float32) * s,  # ffn_1
        "w_ffn2": jax.random.normal(k3, (F_, C), jnp.float32) * s,     # ffn_2
    }


if __name__ == "__main__":
    T, B, C = 8, 2, 32          # seq, batch, embed
    H, K, F_ = 4, 9, 64         # heads, conv kernel size, ffn_hidden_size
    Dh = C // H

    key = jax.random.PRNGKey(0)
    kx, kp = jax.random.split(key)
    x = jax.random.normal(kx, (T, B, C), jnp.float32)

    params = init_params(kp, C, H, K, F_)
    cos, sin = rope_tables(T, Dh)
    params["rope_cos"], params["rope_sin"] = cos, sin
    params["rot_mat"] = rotate_half_matrix(Dh)

    pparams = prepare_pallas_params(params)
    out, _ = gpt_block_forward(x, pparams)
    out = jax.block_until_ready(out)

    ref, _ = gpt_block_ref(x, params)
    assert out.shape == (T, B, C)
    assert jnp.allclose(out, ref, atol=2e-2, rtol=2e-2), (
        "mismatch vs pure-JAX reference; max abs diff = "
        f"{float(jnp.max(jnp.abs(out - ref)))}")
    print("KERNEL_OK")
</pallas_src>

<mosaic_0001>
module attributes {stable_mosaic.version = 11 : i64} {
  func.func @_ln_qkv_rope_kernel(%arg0: i32, %arg1: i32, %arg2: memref<1x8x32xf32, #tpu.memory_space<vmem>>, %arg3: memref<1x32xf32, #tpu.memory_space<vmem>>, %arg4: memref<32x160xbf16, #tpu.memory_space<vmem>>, %arg5: memref<8x32xf32, #tpu.memory_space<vmem>>, %arg6: memref<8x32xf32, #tpu.memory_space<vmem>>, %arg7: memref<1x8x32xbf16, #tpu.memory_space<vmem>>, %arg8: memref<1x8x32xbf16, #tpu.memory_space<vmem>>, %arg9: memref<1x8x32xbf16, #tpu.memory_space<vmem>>) attributes {dimension_semantics = [#tpu.dimension_semantics<parallel>, #tpu.dimension_semantics<parallel>], iteration_bounds = array<i64: 1, 2>, scalar_prefetch = 0 : i64, scratch_operands = 0 : i64, tpu.core_type = #tpu.core_type<tc>, window_params = [{transform_indices = @transform_0, window_bounds = array<i64: 1, 8, 32>}, {pipeline_mode = #tpu.pipeline_mode<synchronous>, transform_indices = @transform_1, window_bounds = array<i64: 1, 32>}, {pipeline_mode = #tpu.pipeline_mode<synchronous>, transform_indices = @transform_2, window_bounds = array<i64: 32, 160>}, {transform_indices = @transform_3, window_bounds = array<i64: 8, 32>}, {transform_indices = @transform_4, window_bounds = array<i64: 8, 32>}, {transform_indices = @transform_5, window_bounds = array<i64: 1, 8, 32>}, {transform_indices = @transform_6, window_bounds = array<i64: 1, 8, 32>}, {transform_indices = @transform_7, window_bounds = array<i64: 1, 8, 32>}]} {
    %c0 = arith.constant 0 : index
    %c0_0 = arith.constant 0 : index
    %c0_1 = arith.constant 0 : index
    %0 = vector.load %arg2[%c0, %c0_0, %c0_1] : memref<1x8x32xf32, #tpu.memory_space<vmem>>, vector<1x8x32xf32>
    %1 = vector.shape_cast %0 : vector<1x8x32xf32> to vector<8x32xf32>
    %cst = arith.constant dense<0.000000e+00> : vector<8xf32>
    %2 = vector.multi_reduction <add>, %1, %cst [1] : vector<8x32xf32> to vector<8xf32>
    %3 = vector.shape_cast %2 : vector<8xf32> to vector<8x1xf32>
    %cst_2 = arith.constant 3.200000e+01 : f32
    %4 = vector.broadcast %cst_2 : f32 to vector<8x1xf32>
    %5 = arith.divf %3, %4 : vector<8x1xf32>
    %6 = vector.broadcast %5 : vector<8x1xf32> to vector<8x32xf32>
    %7 = arith.subf %1, %6 : vector<8x32xf32>
    %8 = arith.mulf %7, %7 : vector<8x32xf32>
    %cst_3 = arith.constant dense<0.000000e+00> : vector<8xf32>
    %9 = vector.multi_reduction <add>, %8, %cst_3 [1] : vector<8x32xf32> to vector<8xf32>
    %10 = vector.shape_cast %9 : vector<8xf32> to vector<8x1xf32>
    %cst_4 = arith.constant 3.200000e+01 : f32
    %11 = vector.broadcast %cst_4 : f32 to vector<8x1xf32>
    %12 = arith.divf %10, %11 : vector<8x1xf32>
    %cst_5 = arith.constant 9.99999974E-6 : f32
    %13 = vector.broadcast %cst_5 : f32 to vector<8x1xf32>
    %14 = arith.addf %12, %13 : vector<8x1xf32>
    %15 = math.rsqrt %14 : vector<8x1xf32>
    %16 = vector.broadcast %15 : vector<8x1xf32> to vector<8x32xf32>
    %17 = arith.mulf %7, %16 : vector<8x32xf32>
    %c0_6 = arith.constant 0 : index
    %c0_7 = arith.constant 0 : index
    %18 = vector.load %arg3[%c0_6, %c0_7] : memref<1x32xf32, #tpu.memory_space<vmem>>, vector<1x32xf32>
    %19 = vector.broadcast %18 : vector<1x32xf32> to vector<8x32xf32>
    %20 = arith.mulf %17, %19 : vector<8x32xf32>
    %21 = arith.truncf %20 : vector<8x32xf32> to vector<8x32xbf16>
    %c0_8 = arith.constant 0 : index
    %c0_9 = arith.constant 0 : index
    %22 = vector.load %arg4[%c0_8, %c0_9] : memref<32x160xbf16, #tpu.memory_space<vmem>>, vector<32x160xbf16>
    %cst_10 = arith.constant dense<0.000000e+00> : vector<8x160xf32>
    %23 = tpu.matmul %21, %22, %cst_10 {dimension_numbers = #tpu.dot_dimension_numbers<[1], [0], [0], [1], [0, 0, 1, 1], [], []>} : vector<8x32xbf16>, vector<32x160xbf16>, vector<8x160xf32> -> vector<8x160xf32>
    %c0_11 = arith.constant 0 : index
    %c0_12 = arith.constant 0 : index
    %24 = vector.load %arg5[%c0_11, %c0_12] : memref<8x32xf32, #tpu.memory_space<vmem>>, vector<8x32xf32>
    %c0_13 = arith.constant 0 : index
    %c0_14 = arith.constant 0 : index
    %25 = vector.load %arg6[%c0_13, %c0_14] : memref<8x32xf32, #tpu.memory_space<vmem>>, vector<8x32xf32>
    %26 = vector.extract_strided_slice %23 {offsets = [0, 0], sizes = [8, 32], strides = [1, 1]} : vector<8x160xf32> to vector<8x32xf32>
    %27 = arith.mulf %24, %26 : vector<8x32xf32>
    %28 = vector.extract_strided_slice %23 {offsets = [0, 64], sizes = [8, 32], strides = [1, 1]} : vector<8x160xf32> to vector<8x32xf32>
    %29 = arith.mulf %25, %28 : vector<8x32xf32>
    %30 = arith.addf %27, %29 : vector<8x32xf32>
    %31 = arith.truncf %30 : vector<8x32xf32> to vector<8x32xbf16>
    %c0_15 = arith.constant 0 : index
    %c0_16 = arith.constant 0 : index
    %c0_17 = arith.constant 0 : index
    %32 = vector.load %arg7[%c0_15, %c0_16, %c0_17] : memref<1x8x32xbf16, #tpu.memory_space<vmem>>, vector<1x8x32xbf16>
    %33 = vector.shape_cast %32 : vector<1x8x32xbf16> to vector<8x32xbf16>
    %34 = vector.shape_cast %31 : vector<8x32xbf16> to vector<1x8x32xbf16>
    tpu.vector_store %arg7[%c0_15, %c0_16, %c0_17], %34 {strides = array<i32>} : memref<1x8x32xbf16, #tpu.memory_space<vmem>>, vector<1x8x32xbf16>,
    %35 = vector.extract_strided_slice %23 {offsets = [0, 32], sizes = [8, 32], strides = [1, 1]} : vector<8x160xf32> to vector<8x32xf32>
    %36 = arith.mulf %24, %35 : vector<8x32xf32>
    %37 = vector.extract_strided_slice %23 {offsets = [0, 96], sizes = [8, 32], strides = [1, 1]} : vector<8x160xf32> to vector<8x32xf32>
    %38 = arith.mulf %25, %37 : vector<8x32xf32>
    %39 = arith.addf %36, %38 : vector<8x32xf32>
    %40 = arith.truncf %39 : vector<8x32xf32> to vector<8x32xbf16>
    %c0_18 = arith.constant 0 : index
    %c0_19 = arith.constant 0 : index
    %c0_20 = arith.constant 0 : index
    %41 = vector.load %arg8[%c0_18, %c0_19, %c0_20] : memref<1x8x32xbf16, #tpu.memory_space<vmem>>, vector<1x8x32xbf16>
    %42 = vector.shape_cast %41 : vector<1x8x32xbf16> to vector<8x32xbf16>
    %43 = vector.shape_cast %40 : vector<8x32xbf16> to vector<1x8x32xbf16>
    tpu.vector_store %arg8[%c0_18, %c0_19, %c0_20], %43 {strides = array<i32>} : memref<1x8x32xbf16, #tpu.memory_space<vmem>>, vector<1x8x32xbf16>,
    %44 = vector.extract_strided_slice %23 {offsets = [0, 128], sizes = [8, 32], strides = [1, 1]} : vector<8x160xf32> to vector<8x32xf32>
    %45 = arith.truncf %44 : vector<8x32xf32> to vector<8x32xbf16>
    %c0_21 = arith.constant 0 : index
    %c0_22 = arith.constant 0 : index
    %c0_23 = arith.constant 0 : index
    %46 = vector.load %arg9[%c0_21, %c0_22, %c0_23] : memref<1x8x32xbf16, #tpu.memory_space<vmem>>, vector<1x8x32xbf16>
    %47 = vector.shape_cast %46 : vector<1x8x32xbf16> to vector<8x32xbf16>
    %48 = vector.shape_cast %45 : vector<8x32xbf16> to vector<1x8x32xbf16>
    tpu.vector_store %arg9[%c0_21, %c0_22, %c0_23], %48 {strides = array<i32>} : memref<1x8x32xbf16, #tpu.memory_space<vmem>>, vector<1x8x32xbf16>,
    return
  }
  func.func @transform_0(%arg0: i32, %arg1: i32) -> (i32, i32, i32) {
    %c0_i32 = arith.constant 0 : i32
    %c0_i32_0 = arith.constant 0 : i32
    return %arg1, %arg0, %c0_i32 : i32, i32, i32
  }
  func.func @transform_1(%arg0: i32, %arg1: i32) -> (i32, i32) {
    %c0_i32 = arith.constant 0 : i32
    %c0_i32_0 = arith.constant 0 : i32
    %c0_i32_1 = arith.constant 0 : i32
    return %c0_i32, %c0_i32_0 : i32, i32
  }
  func.func @transform_2(%arg0: i32, %arg1: i32) -> (i32, i32) {
    %c0_i32 = arith.constant 0 : i32
    %c0_i32_0 = arith.constant 0 : i32
    %c0_i32_1 = arith.constant 0 : i32
    return %c0_i32, %c0_i32_0 : i32, i32
  }
  func.func @transform_3(%arg0: i32, %arg1: i32) -> (i32, i32) {
    %c0_i32 = arith.constant 0 : i32
    %c0_i32_0 = arith.constant 0 : i32
    return %arg0, %c0_i32 : i32, i32
  }
  func.func @transform_4(%arg0: i32, %arg1: i32) -> (i32, i32) {
    %c0_i32 = arith.constant 0 : i32
    %c0_i32_0 = arith.constant 0 : i32
    return %arg0, %c0_i32 : i32, i32
  }
  func.func @transform_5(%arg0: i32, %arg1: i32) -> (i32, i32, i32) {
    %c0_i32 = arith.constant 0 : i32
    %c0_i32_0 = arith.constant 0 : i32
    return %arg1, %arg0, %c0_i32 : i32, i32, i32
  }
  func.func @transform_6(%arg0: i32, %arg1: i32) -> (i32, i32, i32) {
    %c0_i32 = arith.constant 0 : i32
    %c0_i32_0 = arith.constant 0 : i32
    return %arg1, %arg0, %c0_i32 : i32, i32, i32
  }
  func.func @transform_7(%arg0: i32, %arg1: i32) -> (i32, i32, i32) {
    %c0_i32 = arith.constant 0 : i32
    %c0_i32_0 = arith.constant 0 : i32
    return %arg1, %arg0, %c0_i32 : i32, i32, i32
  }
}

</mosaic_0001>

<llo_original>
// kernel: tpu_custom_call.1
$region0: #{tpu_custom_call.1}
  #allocation0 [shape = 'u32[]', space=smem, size = 0x4, offset = 0x4, fixed_abs, tag = 'smem constant byte address 0x4 - core index']
  #allocation1 [shape = 'u32[72,128]{1,0:T(1,128)}', space=vmem, size = 0x9000, scoped, tag = 'internal scratch']
  %s0 = inlined_call_operand.hbm [shape: f32[2,8,32], index: 0, kind: input, shape index: {}]
  %s1 = inlined_call_operand.hbm [shape: f32[1,32], index: 1, kind: input, shape index: {}]
  %s2 = inlined_call_operand.hbm [shape: bf16[32,160], index: 2, kind: input, shape index: {}]
  %s3 = inlined_call_operand.hbm [shape: f32[8,32], index: 3, kind: input, shape index: {}]
  %s4 = inlined_call_operand.hbm [shape: f32[8,32], index: 4, kind: input, shape index: {}]
  %s5 = inlined_call_operand.hbm [shape: bf16[2,8,32], index: 5, kind: output, shape index: {0}]
  %s6 = inlined_call_operand.hbm [shape: bf16[2,8,32], index: 6, kind: output, shape index: {1}]
  %s7 = inlined_call_operand.hbm [shape: bf16[2,8,32], index: 7, kind: output, shape index: {2}]
  %8 = xla_tuple %s5, %s6, %s7
  %s9 = sld [smem:[#allocation0]]
  $region89: #{tpu_custom_call.1} parent=0
    _
  %s11 = ssub.s32 1, %s9
  %s12 = scalar_select 0, %s11, %s9
  $region1: #{tpu_custom_call.1} parent=0
    #allocation2 [shape = 'u8[8192]{0}', space=vmem, size = 0x2000, scoped, tag = 'input window, operand 0']
    #allocation3 [shape = 's32[2]{0}', space=sflag, size = 0x8, scoped, tag = 'scoped memory for tpu_custom_call.1']
    #allocation4 [shape = 's32[2]{0}', space=sflag, size = 0x8, scoped, tag = 'scoped memory for tpu_custom_call.1']
    #allocation5 [shape = 'u8[512]{0}', space=vmem, size = 0x400, scoped, tag = 'input window, operand 1, single buffered']
    #allocation6 [shape = 's32[1]{0}', space=sflag, size = 0x4, scoped, tag = 'scoped memory for tpu_custom_call.1']
    #allocation7 [shape = 'u8[16384]{0}', space=vmem, size = 0x4000, scoped, tag = 'input window, operand 2, single buffered']
    #allocation8 [shape = 'u8[4096]{0}', space=vmem, size = 0x1000, scoped, tag = 'input window, operand 3, single buffered']
    #allocation9 [shape = 's32[1]{0}', space=sflag, size = 0x4, scoped, tag = 'scoped memory for tpu_custom_call.1']
    #allocation10 [shape = 'u8[4096]{0}', space=vmem, size = 0x1000, scoped, tag = 'input window, operand 4, single buffered']
    #allocation11 [shape = 'u8[4096]{0}', space=vmem, size = 0x1000, scoped, tag = 'output window, operand 0']
    #allocation12 [shape = 'u8[4096]{0}', space=vmem, size = 0x1000, scoped, tag = 'output window, operand 1']
    #allocation13 [shape = 's32[2]{0}', space=sflag, size = 0x8, scoped, tag = 'scoped memory for tpu_custom_call.1']
    #allocation14 [shape = 'u8[4096]{0}', space=vmem, size = 0x1000, scoped, tag = 'output window, operand 2']
    %13 = vsyncpa [#allocation3], 0
    %s14 = scalar_lea.sflag [#allocation3], 1
    %15 = vsyncpa %s14, 0
    %16 = vsyncpa [#allocation6], 0
    %17 = vsyncpa [#allocation9], 0
    %18 = vsyncpa [#allocation4], 0
    %s19 = scalar_lea.sflag [#allocation4], 1
    %20 = vsyncpa %s19, 0
    %21 = vsyncpa [#allocation13], 0
    %s22 = scalar_lea.sflag [#allocation13], 1
    %23 = vsyncpa %s22, 0
    loop: start=0, step=1, limit=4
    $region2: #{tpu_custom_call.1} parent=1 // loop_pre_header
      _
    $region3: #{tpu_custom_call.1} parent=1 // loop_header
      %s25 = sphi 0, %s29
      %p26 = scmp.ge.s32.totalorder %s25, 4
      %s32 = sphi 0, %s44
      %s33 = sphi 0, %s40
      %s34 = sphi 0, %s32
      %s35 = sphi 0, %s33
      %s36 = sphi 0, %s34
      %s37 = sphi 0, %s35
      %s49 = sphi 0, %s51
      %s52 = sphi 0, %s49
      %s53 = sphi 0, %s52
      %s69 = sphi 0, %s53
      %s73 = sphi 0, %s73
      %s75 = sphi 0, %s73
      %s76 = sphi 0, %s75
      %s90 = sphi 0, %s76
      %s94 = sphi 0, %s94
      %s96 = sphi 0, %s94
      %s97 = sphi 0, %s96
      %s111 = sphi 0, %s97
      %s117 = sphi 0, %s119
      %s120 = sphi 0, %s117
      %s121 = sphi 0, %s120
      %s137 = sphi 0, %s121
      %s143 = sphi 0, %s145
      %s146 = sphi 0, %s143
      %s147 = sphi 0, %s146
      %s163 = sphi 0, %s147
      %s171 = sphi 0, %s173
      %s174 = sphi 0, %s171
      %s175 = sphi 0, %s174
      %s191 = sphi 0, %s175
      %s199 = sphi 0, %s201
      %s202 = sphi 0, %s199
      %s203 = sphi 0, %s202
      %s219 = sphi 0, %s203
      %s227 = sphi 0, %s229
      %s230 = sphi 0, %s227
      %s231 = sphi 0, %s230
      %s247 = sphi 0, %s231
    $region4: #{tpu_custom_call.1} parent=1 // loop_header_branch
      %28 = sbr.rel (%p26) target = $region8
    $region5: #{tpu_custom_call.1} parent=1 // loop_body
      %s30 = ssub.s32 %s25, 1
      %s31 = ssub.s32 %s25, 2
      %s38 = sadd.s32 1, %s33
      %p39 = scmp.ge.s32.totalorder %s38, 2
      %s40 = scalar_select %p39, 0, %s38
      %s41 = sadd.s32 1, %s32
      %s42 = scalar_select %p39, %s41, %s32
      %p43 = scmp.ge.s32.totalorder %s42, 1
      %s44 = scalar_select %p43, 0, %s42
      %s45 = ssub.s32 %s33, %s40
      %s46 = ssub.s32 %s32, %s44
      %s47 = sor.u32 %s45, %s46
      %p48 = scmp.eq.s32.totalorder %s47, 0
      %s50 = sadd.s32 %s49, 1
      %s51 = scalar_select %p48, %s49, %s50
      %p54 = pneg %p48
      %p55 = scmp.eq.s32.totalorder %s25, 1
      %p56 = por %p54, %p55
      %p57 = scmp.ne.s32.totalorder %s49, %s52
      %p58 = scmp.eq.s32.totalorder %s25, 0
      %p59 = por %p57, %p58
      %p60 = scmp.ne.s32.totalorder %s49, %s52
      %p61 = scmp.eq.s32.totalorder %s30, 1
      %p62 = por %p60, %p61
      %p63 = scmp.ne.s32.totalorder %s52, %s53
      %p64 = scmp.eq.s32.totalorder %s30, 0
      %p65 = por %p63, %p64
      %p66 = scmp.ne.s32.totalorder %s52, %s53
      %p67 = scmp.eq.s32.totalorder %s31, 1
      %p68 = por %p66, %p67
      %p70 = scmp.ne.s32.totalorder %s53, %s69
      %p71 = scmp.eq.s32.totalorder %s31, 0
      %p72 = por %p70, %p71
      %s74 = sadd.s32 %s73, 1
      %p77 = scmp.eq.s32.totalorder %s25, 1
      %p78 = scmp.ne.s32.totalorder %s73, %s75
      %p79 = scmp.eq.s32.totalorder %s25, 0
      %p80 = por %p78, %p79
      %p81 = scmp.ne.s32.totalorder %s73, %s75
      %p82 = scmp.eq.s32.totalorder %s30, 1
      %p83 = por %p81, %p82
      %p84 = scmp.ne.s32.totalorder %s75, %s76
      %p85 = scmp.eq.s32.totalorder %s30, 0
      %p86 = por %p84, %p85
      %p87 = scmp.ne.s32.totalorder %s75, %s76
      %p88 = scmp.eq.s32.totalorder %s31, 1
      %p89 = por %p87, %p88
      %p91 = scmp.ne.s32.totalorder %s76, %s90
      %p92 = scmp.eq.s32.totalorder %s31, 0
      %p93 = por %p91, %p92
      %s95 = sadd.s32 %s94, 1
      %p98 = scmp.eq.s32.totalorder %s25, 1
      %p99 = scmp.ne.s32.totalorder %s94, %s96
      %p100 = scmp.eq.s32.totalorder %s25, 0
      %p101 = por %p99, %p100
      %p102 = scmp.ne.s32.totalorder %s94, %s96
      %p103 = scmp.eq.s32.totalorder %s30, 1
      %p104 = por %p102, %p103
      %p105 = scmp.ne.s32.totalorder %s96, %s97
      %p106 = scmp.eq.s32.totalorder %s30, 0
      %p107 = por %p105, %p106
      %p108 = scmp.ne.s32.totalorder %s96, %s97
      %p109 = scmp.eq.s32.totalorder %s31, 1
      %p110 = por %p108, %p109
      %p112 = scmp.ne.s32.totalorder %s97, %s111
      %p113 = scmp.eq.s32.totalorder %s31, 0
      %p114 = por %p112, %p113
      %s115 = ssub.s32 %s32, %s44
      %p116 = scmp.eq.s32.totalorder %s115, 0
      %s118 = sadd.s32 %s117, 1
      %s119 = scalar_select %p116, %s117, %s118
      %p122 = pneg %p116
      %p123 = scmp.eq.s32.totalorder %s25, 1
      %p124 = por %p122, %p123
      %p125 = scmp.ne.s32.totalorder %s117, %s120
      %p126 = scmp.eq.s32.totalorder %s25, 0
      %p127 = por %p125, %p126
      %p128 = scmp.ne.s32.totalorder %s117, %s120
      %p129 = scmp.eq.s32.totalorder %s30, 1
      %p130 = por %p128, %p129
      %p131 = scmp.ne.s32.totalorder %s120, %s121
      %p132 = scmp.eq.s32.totalorder %s30, 0
      %p133 = por %p131, %p132
      %p134 = scmp.ne.s32.totalorder %s120, %s121
      %p135 = scmp.eq.s32.totalorder %s31, 1
      %p136 = por %p134, %p135
      %p138 = scmp.ne.s32.totalorder %s121, %s137
      %p139 = scmp.eq.s32.totalorder %s31, 0
      %p140 = por %p138, %p139
      %s141 = ssub.s32 %s32, %s44
      %p142 = scmp.eq.s32.totalorder %s141, 0
      %s144 = sadd.s32 %s143, 1
      %s145 = scalar_select %p142, %s143, %s144
      %p148 = pneg %p142
      %p149 = scmp.eq.s32.totalorder %s25, 1
      %p150 = por %p148, %p149
      %p151 = scmp.ne.s32.totalorder %s143, %s146
      %p152 = scmp.eq.s32.totalorder %s25, 0
      %p153 = por %p151, %p152
      %p154 = scmp.ne.s32.totalorder %s143, %s146
      %p155 = scmp.eq.s32.totalorder %s30, 1
      %p156 = por %p154, %p155
      %p157 = scmp.ne.s32.totalorder %s146, %s147
      %p158 = scmp.eq.s32.totalorder %s30, 0
      %p159 = por %p157, %p158
      %p160 = scmp.ne.s32.totalorder %s146, %s147
      %p161 = scmp.eq.s32.totalorder %s31, 1
      %p162 = por %p160, %p161
      %p164 = scmp.ne.s32.totalorder %s147, %s163
      %p165 = scmp.eq.s32.totalorder %s31, 0
      %p166 = por %p164, %p165
      %s167 = ssub.s32 %s33, %s40
      %s168 = ssub.s32 %s32, %s44
      %s169 = sor.u32 %s167, %s168
      %p170 = scmp.eq.s32.totalorder %s169, 0
      %s172 = sadd.s32 %s171, 1
      %s173 = scalar_select %p170, %s171, %s172
      %p176 = pneg %p170
      %p177 = scmp.eq.s32.totalorder %s25, 1
      %p178 = por %p176, %p177
      %p179 = scmp.ne.s32.totalorder %s171, %s174
      %p180 = scmp.eq.s32.totalorder %s25, 0
      %p181 = por %p179, %p180
      %p182 = scmp.ne.s32.totalorder %s171, %s174
      %p183 = scmp.eq.s32.totalorder %s30, 1
      %p184 = por %p182, %p183
      %p185 = scmp.ne.s32.totalorder %s174, %s175
      %p186 = scmp.eq.s32.totalorder %s30, 0
      %p187 = por %p185, %p186
      %p188 = scmp.ne.s32.totalorder %s174, %s175
      %p189 = scmp.eq.s32.totalorder %s31, 1
      %p190 = por %p188, %p189
      %p192 = scmp.ne.s32.totalorder %s175, %s191
      %p193 = scmp.eq.s32.totalorder %s31, 0
      %p194 = por %p192, %p193
      %s195 = ssub.s32 %s33, %s40
      %s196 = ssub.s32 %s32, %s44
      %s197 = sor.u32 %s195, %s196
      %p198 = scmp.eq.s32.totalorder %s197, 0
      %s200 = sadd.s32 %s199, 1
      %s201 = scalar_select %p198, %s199, %s200
      %p204 = pneg %p198
      %p205 = scmp.eq.s32.totalorder %s25, 1
      %p206 = por %p204, %p205
      %p207 = scmp.ne.s32.totalorder %s199, %s202
      %p208 = scmp.eq.s32.totalorder %s25, 0
      %p209 = por %p207, %p208
      %p210 = scmp.ne.s32.totalorder %s199, %s202
      %p211 = scmp.eq.s32.totalorder %s30, 1
      %p212 = por %p210, %p211
      %p213 = scmp.ne.s32.totalorder %s202, %s203
      %p214 = scmp.eq.s32.totalorder %s30, 0
      %p215 = por %p213, %p214
      %p216 = scmp.ne.s32.totalorder %s202, %s203
      %p217 = scmp.eq.s32.totalorder %s31, 1
      %p218 = por %p216, %p217
      %p220 = scmp.ne.s32.totalorder %s203, %s219
      %p221 = scmp.eq.s32.totalorder %s31, 0
      %p222 = por %p220, %p221
      %s223 = ssub.s32 %s33, %s40
      %s224 = ssub.s32 %s32, %s44
      %s225 = sor.u32 %s223, %s224
      %p226 = scmp.eq.s32.totalorder %s225, 0
      %s228 = sadd.s32 %s227, 1
      %s229 = scalar_select %p226, %s227, %s228
      %p232 = pneg %p226
      %p233 = scmp.eq.s32.totalorder %s25, 1
      %p234 = por %p232, %p233
      %p235 = scmp.ne.s32.totalorder %s227, %s230
      %p236 = scmp.eq.s32.totalorder %s25, 0
      %p237 = por %p235, %p236
      %p238 = scmp.ne.s32.totalorder %s227, %s230
      %p239 = scmp.eq.s32.totalorder %s30, 1
      %p240 = por %p238, %p239
      %p241 = scmp.ne.s32.totalorder %s230, %s231
      %p242 = scmp.eq.s32.totalorder %s30, 0
      %p243 = por %p241, %p242
      %p244 = scmp.ne.s32.totalorder %s230, %s231
      %p245 = scmp.eq.s32.totalorder %s31, 1
      %p246 = por %p244, %p245
      %p248 = scmp.ne.s32.totalorder %s231, %s247
      %p249 = scmp.eq.s32.totalorder %s31, 0
      %p250 = por %p248, %p249
      %p251 = scmp.le.s32.totalorder 1, %s25
      %p252 = scmp.lt.s32.totalorder %s25, 3
      %p253 = pnand %p251, %p252
      %p254 = pneg %p253
      // Predicated region
      $region9: #{tpu_custom_call.1} parent=5 // pred_check
        _
      $region10: #{tpu_custom_call.1} parent=5 // pred_check_branch
        %256 = sbr.rel (%p253) target = $region12
      $region11: #{tpu_custom_call.1} parent=5 // pred_region
        %s257 = ssub.s32 %s25, 1
        // Predicated region
        $region13: #{tpu_custom_call.1} parent=11 // pred_check
          %p258 = pneg %p86
        $region14: #{tpu_custom_call.1} parent=11 // pred_check_branch
          %260 = sbr.rel (%p258) target = $region16
        $region15: #{tpu_custom_call.1} parent=11 // pred_region
          %262 = vsyncadd [#allocation6], 0
          %s264 = sshll.u32 %s1, 4
          %s265 = int_to_ptr.hbm [resolvable:$true] %s264
          %s266 = sshll.u32 [#allocation5], 4
          %s267 = int_to_ptr.vmem [resolvable:$true] %s266
          %269 = dma.hbm_to_vmem [thread:$0]  %s265, 16, %s267, [#allocation6]
        $region16: #{tpu_custom_call.1} parent=11 // pred_fallthru
          _
        // Predicated region
        $region17: #{tpu_custom_call.1} parent=11 // pred_check
          %p270 = pneg %p107
        $region18: #{tpu_custom_call.1} parent=11 // pred_check_branch
          %272 = sbr.rel (%p270) target = $region20
        $region19: #{tpu_custom_call.1} parent=11 // pred_region
          %274 = vsyncadd [#allocation6], 0
          %s275 = sshll.u32 %s2, 4
          %s276 = int_to_ptr.hbm [resolvable:$true] %s275
          %s277 = sshll.u32 [#allocation7], 4
          %s278 = int_to_ptr.vmem [resolvable:$true] %s277
          %283 = dma.hbm_to_vmem [thread:$0]  %s276, 512, %s278, [#allocation6], 128, 128, 8
        $region20: #{tpu_custom_call.1} parent=11 // pred_fallthru
          _
        // Predicated region
        $region21: #{tpu_custom_call.1} parent=11 // pred_check
          %p284 = pneg %p133
        $region22: #{tpu_custom_call.1} parent=11 // pred_check_branch
          %286 = sbr.rel (%p284) target = $region24
        $region23: #{tpu_custom_call.1} parent=11 // pred_region
          %288 = vsyncadd [#allocation9], 0
          %s289 = smul.addr %s34, 8
          %s290 = scalar_lea.hbm %s3, %s289
          %s292 = sshll.u32 %s290, 4
          %s293 = int_to_ptr.hbm [resolvable:$true] %s292
          %s294 = sshll.u32 [#allocation8], 4
          %s295 = int_to_ptr.vmem [resolvable:$true] %s294
          %297 = dma.hbm_to_vmem [thread:$0]  %s293, 128, %s295, [#allocation9]
        $region24: #{tpu_custom_call.1} parent=11 // pred_fallthru
          _
        // Predicated region
        $region25: #{tpu_custom_call.1} parent=11 // pred_check
          %p298 = pneg %p159
        $region26: #{tpu_custom_call.1} parent=11 // pred_check_branch
          %300 = sbr.rel (%p298) target = $region28
        $region27: #{tpu_custom_call.1} parent=11 // pred_region
          %302 = vsyncadd [#allocation9], 0
          %s303 = smul.addr %s34, 8
          %s304 = scalar_lea.hbm %s4, %s303
          %s306 = sshll.u32 %s304, 4
          %s307 = int_to_ptr.hbm [resolvable:$true] %s306
          %s308 = sshll.u32 [#allocation10], 4
          %s309 = int_to_ptr.vmem [resolvable:$true] %s308
          %311 = dma.hbm_to_vmem [thread:$0]  %s307, 128, %s309, [#allocation9]
        $region28: #{tpu_custom_call.1} parent=11 // pred_fallthru
          _
      $region12: #{tpu_custom_call.1} parent=5 // pred_fallthru
        _
      %p312 = scmp.lt.s32.totalorder %s25, 2
      // Predicated region
      $region29: #{tpu_custom_call.1} parent=5 // pred_check
        %p313 = pneg %p312
      $region30: #{tpu_custom_call.1} parent=5 // pred_check_branch
        %315 = sbr.rel (%p313) target = $region32
      $region31: #{tpu_custom_call.1} parent=5 // pred_region
        // Predicated region
        $region33: #{tpu_custom_call.1} parent=31 // pred_check
          %p316 = pneg %p59
        $region34: #{tpu_custom_call.1} parent=31 // pred_check_branch
          %318 = sbr.rel (%p316) target = $region36
        $region35: #{tpu_custom_call.1} parent=31 // pred_region
          %s319 = sand.u32 %s49, 1
          %s320 = scalar_lea.sflag [#allocation3], %s319
          %s321 = sand.u32 %s49, 1
          %s322 = smul.addr %s321, 8
          %s323 = scalar_lea.vmem [#allocation2], %s322
          %325 = vsyncadd %s320, 0
          %s326 = sadd.s32 %s32, %s33
          %s327 = smul.addr %s326, 8
          %s328 = scalar_lea.hbm %s0, %s327
          %s330 = sshll.u32 %s328, 4
          %s331 = int_to_ptr.hbm [resolvable:$true] %s330
          %s332 = sshll.u32 %s323, 4
          %s333 = int_to_ptr.vmem [resolvable:$true] %s332
          %335 = dma.hbm_to_vmem [thread:$0]  %s331, 128, %s333, %s320
        $region36: #{tpu_custom_call.1} parent=31 // pred_fallthru
          _
      $region32: #{tpu_custom_call.1} parent=5 // pred_fallthru
        _
      %p336 = scmp.le.s32.totalorder 1, %s25
      %p337 = scmp.lt.s32.totalorder %s25, 3
      %p338 = pnand %p336, %p337
      %p339 = pneg %p338
      // Predicated region
      $region37: #{tpu_custom_call.1} parent=5 // pred_check
        _
      $region38: #{tpu_custom_call.1} parent=5 // pred_check_branch
        %341 = sbr.rel (%p338) target = $region40
      $region39: #{tpu_custom_call.1} parent=5 // pred_region
        %s342 = ssub.s32 %s25, 1
        %s343 = sand.u32 %s52, 1
        %s344 = scalar_lea.sflag [#allocation3], %s343
        %s345 = sand.u32 %s52, 1
        %s346 = smul.addr %s345, 8
        %s347 = scalar_lea.vmem [#allocation2], %s346
        // Predicated region
        $region41: #{tpu_custom_call.1} parent=39 // pred_check
          %p348 = pneg %p65
        $region42: #{tpu_custom_call.1} parent=39 // pred_check_branch
          %350 = sbr.rel (%p348) target = $region44
        $region43: #{tpu_custom_call.1} parent=39 // pred_region
          %352 = dma.done %s344, 128
        $region44: #{tpu_custom_call.1} parent=39 // pred_fallthru
          _
        // Predicated region
        $region45: #{tpu_custom_call.1} parent=39 // pred_check
          %p353 = pneg %p86
        $region46: #{tpu_custom_call.1} parent=39 // pred_check_branch
          %355 = sbr.rel (%p353) target = $region48
        $region47: #{tpu_custom_call.1} parent=39 // pred_region
          %357 = dma.done [#allocation6], 16
        $region48: #{tpu_custom_call.1} parent=39 // pred_fallthru
          _
        // Predicated region
        $region49: #{tpu_custom_call.1} parent=39 // pred_check
          %p358 = pneg %p107
        $region50: #{tpu_custom_call.1} parent=39 // pred_check_branch
          %360 = sbr.rel (%p358) target = $region52
        $region51: #{tpu_custom_call.1} parent=39 // pred_region
          %362 = dma.done [#allocation6], 512
        $region52: #{tpu_custom_call.1} parent=39 // pred_fallthru
          _
        // Predicated region
        $region53: #{tpu_custom_call.1} parent=39 // pred_check
          %p363 = pneg %p133
        $region54: #{tpu_custom_call.1} parent=39 // pred_check_branch
          %365 = sbr.rel (%p363) target = $region56
        $region55: #{tpu_custom_call.1} parent=39 // pred_region
          %367 = dma.done [#allocation9], 128
        $region56: #{tpu_custom_call.1} parent=39 // pred_fallthru
          _
        // Predicated region
        $region57: #{tpu_custom_call.1} parent=39 // pred_check
          %p368 = pneg %p159
        $region58: #{tpu_custom_call.1} parent=39 // pred_check_branch
          %370 = sbr.rel (%p368) target = $region60
        $region59: #{tpu_custom_call.1} parent=39 // pred_region
          %372 = dma.done [#allocation9], 128
        $region60: #{tpu_custom_call.1} parent=39 // pred_fallthru
          _
        %s373 = sand.u32 %s52, 1
        %s374 = scalar_lea.sflag [#allocation3], %s373
        %s375 = sand.u32 %s52, 1
        %s376 = smul.addr %s375, 8
        %s377 = scalar_lea.vmem [#allocation2], %s376
        %p378 = pneg %p65
        %p379 = pneg %p62
        %p380 = pneg %p86
        %p381 = pneg %p83
        %p382 = pneg %p107
        %p383 = pneg %p104
        %p384 = pneg %p133
        %p385 = pneg %p130
        %p386 = pneg %p159
        %p387 = pneg %p156
        %p388 = pneg %p187
        %p389 = pneg %p184
        %s390 = sand.u32 %s174, 1
        %s391 = scalar_lea.sflag [#allocation4], %s390
        %s392 = sand.u32 %s174, 1
        %s393 = smul.addr %s392, 4
        %s394 = scalar_lea.vmem [#allocation11], %s393
        %p395 = pneg %p215
        %p396 = pneg %p212
        %s397 = sand.u32 %s30, 1
        %s398 = scalar_lea.sflag [#allocation13], %s397
        %s399 = sand.u32 %s202, 1
        %s400 = smul.addr %s399, 4
        %s401 = scalar_lea.vmem [#allocation12], %s400
        %p402 = pneg %p243
        %p403 = pneg %p240
        %s404 = sand.u32 %s30, 1
        %s405 = scalar_lea.sflag [#allocation13], %s404
        %s406 = sand.u32 %s230, 1
        %s407 = smul.addr %s406, 4
        %s408 = scalar_lea.vmem [#allocation14], %s407
        %v410 = vld [vmem:[%s347] sm:$0xff]
        %vm411 = vcmask 261120
        %v412 = vsel %vm411, %v410, 0.0
        %413 = vadd.xlane.f32.xlu0 %v412
        %v414 = vpop.xlane.xlu0 %413
        %v415 = vrcp.pop 32.0
        %v416 = vmul.f32 32.0, %v415
        %v417 = vsub.f32 1.0, %v416
        %v418 = vmul.f32 %v415, %v417
        %v419 = vadd.f32 %v415, %v418
        %vm420 = vweird.f32 %v415
        %v421 = vsel %vm420, %v415, %v419
        %v422 = vmul.f32 %v414, %v421
        %v423 = vsub.f32 %v410, %v422
        %v424 = vmul.f32 %v423, %v423
        %v425 = vsel %vm411, %v424, 0.0
        %426 = vadd.xlane.f32.xlu0 %v425
        %v427 = vpop.xlane.xlu0 %426
        %v428 = vmul.f32 %v427, %v421
        %v429 = vadd.f32 %v428, 1e-05
        %v430 = vrsqrt.pop %v429
        %v431 = vmul.f32 %v430, %v429
        %v432 = vmul.f32 %v431, %v430
        %v433 = vmul.f32 0.5, %v432
        %v434 = vsub.f32 1.5, %v433
        %v435 = vmul.f32 %v430, %v434
        %vm436 = vweird.f32 %v429
        %vm437 = vweird.f32 %v430
        %vm438 = vmor %vm436, %vm437
        %v439 = vsel %vm438, %v430, %v435
        %v440 = vmul.f32 %v423, %v439
        %v441 = vld [vmem:[#allocation5] sm:$0x1]
        %v443 = vperm.slane %v441, 0
        %v445 = vmul.f32 %v440, %v443
        %v446 = vpack.c.bf16 %v445, %v445
        %v447 = vld [vmem:[#allocation7] sm:$0xff]
        %v448 = vld [vmem:[#allocation7 + $0x8] sm:$0xff]
        %v449 = vld [vmem:[#allocation7 + $0x10] sm:$0xff]
        %v450 = vld [vmem:[#allocation7 + $0x18] sm:$0xff]
        %v455 = vunpack.c.l.b16 %v447
        %v456 = vunpack.c.h.b16 %v447
        %v457 = vunpack.c.l.b16 %v448
        %v458 = vunpack.c.h.b16 %v448
        %v459 = vunpack.c.l.b16 %v449
        %v460 = vunpack.c.h.b16 %v449
        %v461 = vunpack.c.l.b16 %v450
        %v462 = vunpack.c.h.b16 %v450
        %v463 = vpack.c.b16 %v457, %v455
        %v464 = vpack.c.b16 %v458, %v456
        %v465 = vpack.c.b16 %v461, %v459
        %v466 = vpack.c.b16 %v462, %v460
        %v472 = vsel %vm411, %v446, 0
        %474 = vmatpush.bf16.msra.mxu0 0
        %475 = vmatpush.bf16.msra.mxu0 0
        %476 = vmatpush.bf16.msra.mxu0 0
        %477 = vmatpush.bf16.msra.mxu0 0
        %478 = vmatpush.bf16.msra.mxu0 0
        %479 = vmatpush.bf16.msra.mxu0 0
        %480 = vmatpush.bf16.msra.mxu0 %v465
        %481 = vmatpush.bf16.msra.mxu0 %v463
        %482 = vmatmul.bf16.gmra.mxu0 %v472
        %v483 = vpop.f32.mrf.mxu0
        %v484 = vadd.f32 0.0, %v483
        %v485 = vpop.f32.mrf.mxu0
        %486 = vdwg.mxu0
        %487 = vmatpush.bf16.msra.mxu0 0
        %488 = vmatpush.bf16.msra.mxu0 0
        %489 = vmatpush.bf16.msra.mxu0 0
        %490 = vmatpush.bf16.msra.mxu0 0
        %491 = vmatpush.bf16.msra.mxu0 0
        %492 = vmatpush.bf16.msra.mxu0 0
        %493 = vmatpush.bf16.msra.mxu0 %v466
        %494 = vmatpush.bf16.msra.mxu0 %v464
        %495 = vmatmul.bf16.gmra.mxu0 %v472
        %v496 = vpop.f32.mrf.mxu0
        %v497 = vadd.f32 0.0, %v496
        %v498 = vpop.f32.mrf.mxu0
        %499 = vdwg.mxu0
        %v500 = vld [vmem:[#allocation8] sm:$0xff]
        %v501 = vld [vmem:[#allocation10] sm:$0xff]
        %v502 = vmul.f32 %v500, %v484
        %504 = vrot.lane.b32.xlu0 %v484, 64
        %v505 = vpop.permute.xlu0 %504
        %v507 = vmul.f32 %v501, %v505
        %v508 = vadd.f32 %v502, %v507
        %v509 = vpack.c.bf16 %v508, %v508
        %vm510 = vcmask 257024
        %511 = vst.msk [vmem:[%s394] sm:$0xf] %vm510, %v509
        %512 = vrot.lane.b32.xlu0 %v484, 96
        %v513 = vpop.permute.xlu0 %512
        %v515 = vmul.f32 %v500, %v513
        %516 = vrot.lane.b32.xlu0 %v484, 32
        %v517 = vpop.permute.xlu0 %516
        %v519 = vmul.f32 %v501, %v517
        %v520 = vadd.f32 %v515, %v519
        %v521 = vpack.c.bf16 %v520, %v520
        %522 = vst.msk [vmem:[%s401] sm:$0xf] %vm510, %v521
        %v523 = vpack.c.bf16 %v497, %v497
        %524 = vst.msk [vmem:[%s408] sm:$0xf] %vm510, %v523
        %s525 = sand.u32 %s174, 1
        %s526 = scalar_lea.sflag [#allocation4], %s525
        %s527 = sand.u32 %s174, 1
        %s528 = smul.addr %s527, 4
        %s529 = scalar_lea.vmem [#allocation11], %s528
        %s530 = sand.u32 %s30, 1
        %s531 = scalar_lea.sflag [#allocation13], %s530
        %s532 = sand.u32 %s202, 1
        %s533 = smul.addr %s532, 4
        %s534 = scalar_lea.vmem [#allocation12], %s533
        %s535 = sand.u32 %s30, 1
        %s536 = scalar_lea.sflag [#allocation13], %s535
        %s537 = sand.u32 %s230, 1
        %s538 = smul.addr %s537, 4
        %s539 = scalar_lea.vmem [#allocation14], %s538
        // Predicated region
        $region61: #{tpu_custom_call.1} parent=39 // pred_check
          %p540 = pneg %p184
        $region62: #{tpu_custom_call.1} parent=39 // pred_check_branch
          %542 = sbr.rel (%p540) target = $region64
        $region63: #{tpu_custom_call.1} parent=39 // pred_region
          %544 = vsyncadd %s526, 0
          %s545 = sadd.s32 %s34, %s35
          %s546 = smul.addr %s545, 4
          %s547 = scalar_lea.hbm %s5, %s546
          %s549 = sshll.u32 %s529, 4
          %s550 = int_to_ptr.vmem [resolvable:$true] %s549
          %s551 = sshll.u32 %s547, 4
          %s552 = int_to_ptr.hbm [resolvable:$true] %s551
          %554 = dma.vmem_to_hbm [thread:$0]  %s550, 64, %s552, %s526
        $region64: #{tpu_custom_call.1} parent=39 // pred_fallthru
          _
        // Predicated region
        $region65: #{tpu_custom_call.1} parent=39 // pred_check
          %p555 = pneg %p212
        $region66: #{tpu_custom_call.1} parent=39 // pred_check_branch
          %557 = sbr.rel (%p555) target = $region68
        $region67: #{tpu_custom_call.1} parent=39 // pred_region
          %559 = vsyncadd %s531, 0
          %s560 = sadd.s32 %s34, %s35
          %s561 = smul.addr %s560, 4
          %s562 = scalar_lea.hbm %s6, %s561
          %s564 = sshll.u32 %s534, 4
          %s565 = int_to_ptr.vmem [resolvable:$true] %s564
          %s566 = sshll.u32 %s562, 4
          %s567 = int_to_ptr.hbm [resolvable:$true] %s566
          %569 = dma.vmem_to_hbm [thread:$0]  %s565, 64, %s567, %s531
        $region68: #{tpu_custom_call.1} parent=39 // pred_fallthru
          _
        // Predicated region
        $region69: #{tpu_custom_call.1} parent=39 // pred_check
          %p570 = pneg %p240
        $region70: #{tpu_custom_call.1} parent=39 // pred_check_branch
          %572 = sbr.rel (%p570) target = $region72
        $region71: #{tpu_custom_call.1} parent=39 // pred_region
          %574 = vsyncadd %s536, 0
          %s575 = sadd.s32 %s34, %s35
          %s576 = smul.addr %s575, 4
          %s577 = scalar_lea.hbm %s7, %s576
          %s579 = sshll.u32 %s539, 4
          %s580 = int_to_ptr.vmem [resolvable:$true] %s579
          %s581 = sshll.u32 %s577, 4
          %s582 = int_to_ptr.hbm [resolvable:$true] %s581
          %584 = dma.vmem_to_hbm [thread:$0]  %s580, 64, %s582, %s536
        $region72: #{tpu_custom_call.1} parent=39 // pred_fallthru
          _
      $region40: #{tpu_custom_call.1} parent=5 // pred_fallthru
        _
      %p585 = scmp.le.s32.totalorder 2, %s25
      // Predicated region
      $region73: #{tpu_custom_call.1} parent=5 // pred_check
        %p586 = pneg %p585
      $region74: #{tpu_custom_call.1} parent=5 // pred_check_branch
        %588 = sbr.rel (%p586) target = $region76
      $region75: #{tpu_custom_call.1} parent=5 // pred_region
        %s589 = ssub.s32 %s25, 2
        // Predicated region
        $region77: #{tpu_custom_call.1} parent=75 // pred_check
          %p590 = pneg %p190
        $region78: #{tpu_custom_call.1} parent=75 // pred_check_branch
          %592 = sbr.rel (%p590) target = $region80
        $region79: #{tpu_custom_call.1} parent=75 // pred_region
          %s593 = sand.u32 %s175, 1
          %s594 = scalar_lea.sflag [#allocation4], %s593
          %s595 = sand.u32 %s175, 1
          %s596 = smul.addr %s595, 4
          %s597 = scalar_lea.vmem [#allocation11], %s596
          %599 = dma.done %s594, 64
        $region80: #{tpu_custom_call.1} parent=75 // pred_fallthru
          _
        // Predicated region
        $region81: #{tpu_custom_call.1} parent=75 // pred_check
          %p600 = pneg %p218
        $region82: #{tpu_custom_call.1} parent=75 // pred_check_branch
          %602 = sbr.rel (%p600) target = $region84
        $region83: #{tpu_custom_call.1} parent=75 // pred_region
          %s603 = sand.u32 %s31, 1
          %s604 = scalar_lea.sflag [#allocation13], %s603
          %s605 = sand.u32 %s203, 1
          %s606 = smul.addr %s605, 4
          %s607 = scalar_lea.vmem [#allocation12], %s606
          %609 = dma.done %s604, 64
        $region84: #{tpu_custom_call.1} parent=75 // pred_fallthru
          _
        // Predicated region
        $region85: #{tpu_custom_call.1} parent=75 // pred_check
          %p610 = pneg %p246
        $region86: #{tpu_custom_call.1} parent=75 // pred_check_branch
          %612 = sbr.rel (%p610) target = $region88
        $region87: #{tpu_custom_call.1} parent=75 // pred_region
          %s613 = sand.u32 %s31, 1
          %s614 = scalar_lea.sflag [#allocation13], %s613
          %s615 = sand.u32 %s231, 1
          %s616 = smul.addr %s615, 4
          %s617 = scalar_lea.vmem [#allocation14], %s616
          %619 = dma.done %s614, 64
        $region88: #{tpu_custom_call.1} parent=75 // pred_fallthru
          _
      $region76: #{tpu_custom_call.1} parent=5 // pred_fallthru
        _
    $region6: #{tpu_custom_call.1} parent=1 // loop_footer
      %s29 = sadd.s32 1, %s25
    $region7: #{tpu_custom_call.1} parent=1 // loop_footer_branch
      %24 = sbr.rel target = $region3
    $region8: #{tpu_custom_call.1} parent=1 // loop_exit
      _
    %620 = vsyncpa [#allocation3], 1
    %s621 = scalar_lea.sflag [#allocation3], 1
    %622 = vsyncpa %s621, 1
    %623 = vsyncpa [#allocation6], 1
    %624 = vsyncpa [#allocation9], 1
    %625 = vsyncpa [#allocation4], 1
    %s626 = scalar_lea.sflag [#allocation4], 1
    %627 = vsyncpa %s626, 1
    %628 = vsyncpa [#allocation13], 1
    %s629 = scalar_lea.sflag [#allocation13], 1
    %630 = vsyncpa %s629, 1

</llo_original>
